<compile_context>
chip_gen: v7x
topology: tpu7x:2x2x1
jax: 0.10.0
libtpu: 0.0.40
codegen_flags: <defaults>
</compile_context>

<pallas_src>
import jax
import jax.numpy as jnp
from jax.experimental import pallas as pl
from jax.experimental.pallas import tpu as pltpu

ALPHA = 0.2        # LeakyReLU negative slope used by the GAT layer
F32 = jnp.float32
BF16 = jnp.bfloat16


# --------------------------------------------------------------------------- #
# helpers
# --------------------------------------------------------------------------- #
def _pick_tile(n, cap, align):
    """Largest divisor of n that is a multiple of `align` and <= cap; else n."""
    best = None
    for t in range(align, min(n, cap) + 1, align):
        if n % t == 0:
            best = t
    return best if best is not None else n


def _vmem_limit_bytes():
    """Scoped-VMEM budget for the attention pass, with per-chip headroom."""
    try:
        cap = pltpu.get_tpu_info().vmem_capacity_bytes
    except Exception:
        cap = 64 * 1024 * 1024
    # 64 MiB (v7x) -> 48 MiB; 128 MiB (v5e/v6e) -> 100 MiB.
    return min(cap - 16 * 1024 * 1024, 100 * 1024 * 1024)


# --------------------------------------------------------------------------- #
# Kernel 1: MLP1 (Linear+ReLU, Linear+ReLU) and one fused matmul producing
#           [h | a_src.h | a_dst.h].  Row-tiled over nodes; "parallel" grid.
# --------------------------------------------------------------------------- #
def mlp1_h_kernel(feat_ref, w1_ref, b1_ref, w2_ref, b2_ref, wga_ref,
                  h_ref, ea_ref):
    x = jnp.dot(feat_ref[...], w1_ref[...], preferred_element_type=F32) + b1_ref[...]
    x = jnp.maximum(x, 0.0)
    x = jnp.dot(x.astype(BF16), w2_ref[...], preferred_element_type=F32) + b2_ref[...]
    x = jnp.maximum(x, 0.0)                                    # [tq, M] f32

    m = h_ref.shape[-1]
    # fused: [h | e_src e_dst] = x @ [Wg | Wg@a_src | Wg@a_dst]
    hea = jnp.dot(x.astype(BF16), wga_ref[...], preferred_element_type=F32)  # [tq, M+2]
    h_ref[...] = hea[:, :m].astype(BF16)                       # [tq, M] bf16
    ea_ref[...] = hea[:, m:m + 2]                              # [tq, 2] f32


# --------------------------------------------------------------------------- #
# Kernel 2: GAT attention as an online (flash-style) masked softmax over key
#           tiles + ELU + MLP2.  Rows "parallel", keys "arbitrary".
# --------------------------------------------------------------------------- #
def attn_mlp2_kernel(esrc_ref, edst_ref, adj_ref, h_ref,
                     w3_ref, b3_ref, w4_ref, b4_ref, out_ref,
                     m_sc, l_sc, acc_sc):
    kj = pl.program_id(1)

    @pl.when(kj == 0)
    def _():
        m_sc[...] = jnp.full(m_sc.shape, -jnp.inf, dtype=F32)
        l_sc[...] = jnp.zeros(l_sc.shape, dtype=F32)
        acc_sc[...] = jnp.zeros(acc_sc.shape, dtype=F32)

    # e[i, j] = leakyrelu(a_src . h_i + a_dst . h_j)           (f32, [tq, tk])
    e = esrc_ref[...] + edst_ref[...]
    e = jnp.maximum(e, ALPHA * e)                              # LeakyReLU via max

    # online masked softmax (un-normalized): exp(e - m) * adj (adj is 0/1 int8).
    # rowmax of unmasked e >= rowmax of masked e, so exp(e-m)*adj stays exact;
    # the denominator is guarded at the end against total underflow.
    m_new = jnp.maximum(m_sc[...], jnp.max(e, axis=1, keepdims=True))
    scale = jnp.exp(m_sc[...] - m_new)                         # [tq, 1] f32
    p = jnp.exp((e - m_new).astype(BF16)) * adj_ref[...].astype(BF16)   # bf16 chain
    l_sc[...] = scale * l_sc[...] + jnp.sum(p, axis=1, keepdims=True, dtype=F32)
    acc_sc[...] = scale * acc_sc[...] + jnp.dot(p, h_ref[...],
                                                preferred_element_type=F32)
    m_sc[...] = m_new

    @pl.when(kj == pl.num_programs(1) - 1)
    def _():
        # deferred normalization (one [tq, M] multiply instead of [tq, N]).
        inv = pl.reciprocal(jnp.maximum(l_sc[...], 1e-30), approx=True)
        hp = acc_sc[...] * inv                                 # [tq, M]
        # ELU (concat=True branch); min() keeps the dead branch finite.
        g = jnp.where(hp > 0, hp, jnp.exp(jnp.minimum(hp, 0.0)) - 1.0)
        # TODO(synk): Dropout(p=0.2) on attention modeled as identity (eval mode).
        y = jnp.dot(g.astype(BF16), w3_ref[...], preferred_element_type=F32) + b3_ref[...]
        y = jnp.maximum(y, 0.0)
        y = jnp.dot(y.astype(BF16), w4_ref[...], preferred_element_type=F32) + b4_ref[...]
        out_ref[...] = jnp.maximum(y, 0.0)


# --------------------------------------------------------------------------- #
# Host wrapper
# --------------------------------------------------------------------------- #
def resgat_encoder(feature, adj, params):
    N, F = feature.shape
    half = params["w1"].shape[1]
    M = params["w2"].shape[1]

    # dtype prep: bf16 MXU operands, int8 adjacency, f32 biases.
    feat_bf = feature.astype(BF16)
    adj_i8 = (adj > 0).astype(jnp.int8)
    w1 = params["w1"].astype(BF16); b1 = params["b1"]
    w2 = params["w2"].astype(BF16); b2 = params["b2"]
    # fused GAT weight: [Wg | Wg @ a_src | Wg @ a_dst]  ->  [M, M+2]
    a2 = jnp.concatenate([params["a"][:M], params["a"][M:]], axis=1)      # [M, 2]
    wga = jnp.concatenate([params["wg"], params["wg"] @ a2], axis=1).astype(BF16)
    w3 = params["w3"].astype(BF16); b3 = params["b3"]
    w4 = params["w4"].astype(BF16); b4 = params["b4"]

    # decoupled tile sizes
    tq1 = _pick_tile(N, 1024, 8)          # kernel 1 rows (cheap per-step VMEM)
    tq2 = _pick_tile(N, 512, 8)           # kernel 2 rows
    if N // tq2 < 2:                      # give the 2nd TensorCore (v7x) work
        smaller = _pick_tile(N, max(8, tq2 // 2), 8)
        if smaller < tq2:
            tq2 = smaller
    tk = _pick_tile(N, 2048, 128)         # kernel 2 key tile (falls back to N)

    # ---- pass 1: MLP1 + fused [h | attention-logit vectors] ----------------
    h, ea = pl.pallas_call(
        mlp1_h_kernel,
        out_shape=(jax.ShapeDtypeStruct((N, M), BF16),
                   jax.ShapeDtypeStruct((N, 2), F32)),
        grid=(N // tq1,),
        in_specs=[
            pl.BlockSpec((tq1, F), lambda i: (i, 0)),
            pl.BlockSpec((F, half), lambda i: (0, 0)),
            pl.BlockSpec((1, half), lambda i: (0, 0)),
            pl.BlockSpec((half, M), lambda i: (0, 0)),
            pl.BlockSpec((1, M), lambda i: (0, 0)),
            pl.BlockSpec((M, M + 2), lambda i: (0, 0)),
        ],
        out_specs=(pl.BlockSpec((tq1, M), lambda i: (i, 0)),
                   pl.BlockSpec((tq1, 2), lambda i: (i, 0))),
        compiler_params=pltpu.CompilerParams(
            dimension_semantics=("parallel",)),
    )(feat_bf, w1, b1, w2, b2, wga)

    # one-time layout plumbing outside the kernels (pure reshapes)
    e_src = ea[:, 0:1]                    # [N, 1]
    e_dst = ea[:, 1:2].reshape(1, N)      # [1, N]

    # ---- pass 2: online masked softmax attention + ELU + MLP2 ---------------
    out = pl.pallas_call(
        attn_mlp2_kernel,
        out_shape=jax.ShapeDtypeStruct((N, F), F32),
        grid=(N // tq2, N // tk),
        in_specs=[
            pl.BlockSpec((tq2, 1), lambda i, j: (i, 0)),
            pl.BlockSpec((1, tk), lambda i, j: (0, j)),
            pl.BlockSpec((tq2, tk), lambda i, j: (i, j)),
            pl.BlockSpec((tk, M), lambda i, j: (j, 0)),
            pl.BlockSpec((M, half), lambda i, j: (0, 0)),
            pl.BlockSpec((1, half), lambda i, j: (0, 0)),
            pl.BlockSpec((half, F), lambda i, j: (0, 0)),
            pl.BlockSpec((1, F), lambda i, j: (0, 0)),
        ],
        out_specs=pl.BlockSpec((tq2, F), lambda i, j: (i, 0)),
        scratch_shapes=[
            pltpu.VMEM((tq2, 1), F32),    # running max
            pltpu.VMEM((tq2, 1), F32),    # running row-sum
            pltpu.VMEM((tq2, M), F32),    # running accumulator
        ],
        compiler_params=pltpu.CompilerParams(
            dimension_semantics=("parallel", "arbitrary"),
            vmem_limit_bytes=_vmem_limit_bytes()),
    )(e_src, e_dst, adj_i8, h, w3, b3, w4, b4)
    return out


def make_params(key, feature_length, mid):
    """Deterministic synthetic weights (shapes match the PyTorch module)."""
    half = feature_length // 2
    ks = jax.random.split(key, 12)

    def u(k, shape, scale):
        return jax.random.uniform(k, shape, F32, -scale, scale)

    return {
        # MLP1: Linear(F, F/2), Linear(F/2, M)   (stored as [in, out])
        "w1": u(ks[0], (feature_length, half), 0.3),
        "b1": u(ks[1], (1, half), 0.1),
        "w2": u(ks[2], (half, mid), 0.3),
        "b2": u(ks[3], (1, mid), 0.1),
        # GAT: W [M, M], a [2M, 1]  (xavier-like scale)
        "wg": u(ks[4], (mid, mid), 1.414 * (6.0 / (2 * mid)) ** 0.5),
        "a":  u(ks[5], (2 * mid, 1), 1.414 * (6.0 / (2 * mid + 1)) ** 0.5),
        # MLP2: Linear(M, F/2), Linear(F/2, F)
        "w3": u(ks[6], (mid, half), 0.3),
        "b3": u(ks[7], (1, half), 0.1),
        "w4": u(ks[8], (half, feature_length), 0.3),
        "b4": u(ks[9], (1, feature_length), 0.1),
    }


def resgat_encoder_ref(feature, adj, p):
    """Plain-JAX f32 reference, faithful to the PyTorch module."""
    x = jnp.maximum(feature @ p["w1"] + p["b1"], 0.0)
    x = jnp.maximum(x @ p["w2"] + p["b2"], 0.0)
    h = x @ p["wg"]
    M = p["a"].shape[0] // 2
    e = (h @ p["a"][:M]) + (h @ p["a"][M:]).T
    e = jnp.where(e > 0, e, ALPHA * e)
    logits = jnp.where(adj > 0, e, -1.0e12)
    att = jax.nn.softmax(logits, axis=1)
    hp = att @ h
    g = jnp.where(hp > 0, hp, jnp.exp(hp) - 1.0)
    y = jnp.maximum(g @ p["w3"] + p["b3"], 0.0)
    y = jnp.maximum(y @ p["w4"] + p["b4"], 0.0)
    return y


if __name__ == "__main__":
    N = 8                      # number of graph nodes
    feature_length = 32
    encoder_mid = 16

    key = jax.random.PRNGKey(0)
    k_feat, k_adj, k_par = jax.random.split(key, 3)

    feature = jax.random.normal(k_feat, (N, feature_length), F32)
    # symmetric 0/1 adjacency with self loops (self loops keep softmax rows valid)
    r = jax.random.uniform(k_adj, (N, N))
    adj = ((r + r.T) > 0.9).astype(F32)
    adj = jnp.maximum(adj, jnp.eye(N, dtype=F32))

    params = make_params(k_par, feature_length, encoder_mid)

    encoder = jax.jit(resgat_encoder)
    out = encoder(feature, adj, params)
    jax.block_until_ready(out)

    ref = resgat_encoder_ref(feature, adj, params)
    assert out.shape == (N, feature_length)
    assert bool(jnp.all(jnp.isfinite(out)))
    # tolerance accounts for bf16 MXU operands + bf16 exp + approx reciprocal
    assert jnp.allclose(out, ref, atol=5e-2, rtol=5e-2)

    print("KERNEL_OK")
</pallas_src>

<mosaic_0001>
module attributes {stable_mosaic.version = 11 : i64} {
  func.func @mlp1_h_kernel(%arg0: i32, %arg1: memref<8x32xbf16, #tpu.memory_space<vmem>>, %arg2: memref<32x16xbf16, #tpu.memory_space<vmem>>, %arg3: memref<1x16xf32, #tpu.memory_space<vmem>>, %arg4: memref<16x16xbf16, #tpu.memory_space<vmem>>, %arg5: memref<1x16xf32, #tpu.memory_space<vmem>>, %arg6: memref<16x18xbf16, #tpu.memory_space<vmem>>, %arg7: memref<8x16xbf16, #tpu.memory_space<vmem>>, %arg8: memref<8x2xf32, #tpu.memory_space<vmem>>) attributes {dimension_semantics = [#tpu.dimension_semantics<parallel>], iteration_bounds = array<i64: 1>, scalar_prefetch = 0 : i64, scratch_operands = 0 : i64, tpu.core_type = #tpu.core_type<tc>, window_params = [{transform_indices = @transform_0, window_bounds = array<i64: 8, 32>}, {pipeline_mode = #tpu.pipeline_mode<synchronous>, transform_indices = @transform_1, window_bounds = array<i64: 32, 16>}, {pipeline_mode = #tpu.pipeline_mode<synchronous>, transform_indices = @transform_2, window_bounds = array<i64: 1, 16>}, {pipeline_mode = #tpu.pipeline_mode<synchronous>, transform_indices = @transform_3, window_bounds = array<i64: 16, 16>}, {pipeline_mode = #tpu.pipeline_mode<synchronous>, transform_indices = @transform_4, window_bounds = array<i64: 1, 16>}, {pipeline_mode = #tpu.pipeline_mode<synchronous>, transform_indices = @transform_5, window_bounds = array<i64: 16, 18>}, {transform_indices = @transform_6, window_bounds = array<i64: 8, 16>}, {transform_indices = @transform_7, window_bounds = array<i64: 8, 2>}]} {
    %c0 = arith.constant 0 : index
    %c0_0 = arith.constant 0 : index
    %0 = vector.load %arg1[%c0, %c0_0] : memref<8x32xbf16, #tpu.memory_space<vmem>>, vector<8x32xbf16>
    %c0_1 = arith.constant 0 : index
    %c0_2 = arith.constant 0 : index
    %1 = vector.load %arg2[%c0_1, %c0_2] : memref<32x16xbf16, #tpu.memory_space<vmem>>, vector<32x16xbf16>
    %cst = arith.constant dense<0.000000e+00> : vector<8x16xf32>
    %2 = tpu.matmul %0, %1, %cst {dimension_numbers = #tpu.dot_dimension_numbers<[1], [0], [0], [1], [0, 0, 1, 1], [], []>} : vector<8x32xbf16>, vector<32x16xbf16>, vector<8x16xf32> -> vector<8x16xf32>
    %c0_3 = arith.constant 0 : index
    %c0_4 = arith.constant 0 : index
    %3 = vector.load %arg3[%c0_3, %c0_4] : memref<1x16xf32, #tpu.memory_space<vmem>>, vector<1x16xf32>
    %4 = vector.broadcast %3 : vector<1x16xf32> to vector<8x16xf32>
    %5 = arith.addf %2, %4 : vector<8x16xf32>
    %cst_5 = arith.constant 0.000000e+00 : f32
    %6 = vector.broadcast %cst_5 : f32 to vector<8x16xf32>
    %7 = arith.maximumf %5, %6 : vector<8x16xf32>
    %8 = arith.truncf %7 : vector<8x16xf32> to vector<8x16xbf16>
    %c0_6 = arith.constant 0 : index
    %c0_7 = arith.constant 0 : index
    %9 = vector.load %arg4[%c0_6, %c0_7] : memref<16x16xbf16, #tpu.memory_space<vmem>>, vector<16x16xbf16>
    %cst_8 = arith.constant dense<0.000000e+00> : vector<8x16xf32>
    %10 = tpu.matmul %8, %9, %cst_8 {dimension_numbers = #tpu.dot_dimension_numbers<[1], [0], [0], [1], [0, 0, 1, 1], [], []>} : vector<8x16xbf16>, vector<16x16xbf16>, vector<8x16xf32> -> vector<8x16xf32>
    %c0_9 = arith.constant 0 : index
    %c0_10 = arith.constant 0 : index
    %11 = vector.load %arg5[%c0_9, %c0_10] : memref<1x16xf32, #tpu.memory_space<vmem>>, vector<1x16xf32>
    %12 = vector.broadcast %11 : vector<1x16xf32> to vector<8x16xf32>
    %13 = arith.addf %10, %12 : vector<8x16xf32>
    %cst_11 = arith.constant 0.000000e+00 : f32
    %14 = vector.broadcast %cst_11 : f32 to vector<8x16xf32>
    %15 = arith.maximumf %13, %14 : vector<8x16xf32>
    %16 = arith.truncf %15 : vector<8x16xf32> to vector<8x16xbf16>
    %c0_12 = arith.constant 0 : index
    %c0_13 = arith.constant 0 : index
    %17 = vector.load %arg6[%c0_12, %c0_13] : memref<16x18xbf16, #tpu.memory_space<vmem>>, vector<16x18xbf16>
    %cst_14 = arith.constant dense<0.000000e+00> : vector<8x18xf32>
    %18 = tpu.matmul %16, %17, %cst_14 {dimension_numbers = #tpu.dot_dimension_numbers<[1], [0], [0], [1], [0, 0, 1, 1], [], []>} : vector<8x16xbf16>, vector<16x18xbf16>, vector<8x18xf32> -> vector<8x18xf32>
    %19 = vector.extract_strided_slice %18 {offsets = [0, 0], sizes = [8, 16], strides = [1, 1]} : vector<8x18xf32> to vector<8x16xf32>
    %20 = arith.truncf %19 : vector<8x16xf32> to vector<8x16xbf16>
    %c0_15 = arith.constant 0 : index
    %c0_16 = arith.constant 0 : index
    %21 = vector.load %arg7[%c0_15, %c0_16] : memref<8x16xbf16, #tpu.memory_space<vmem>>, vector<8x16xbf16>
    tpu.vector_store %arg7[%c0_15, %c0_16], %20 {strides = array<i32>} : memref<8x16xbf16, #tpu.memory_space<vmem>>, vector<8x16xbf16>,
    %22 = vector.extract_strided_slice %18 {offsets = [0, 16], sizes = [8, 2], strides = [1, 1]} : vector<8x18xf32> to vector<8x2xf32>
    %c0_17 = arith.constant 0 : index
    %c0_18 = arith.constant 0 : index
    %23 = vector.load %arg8[%c0_17, %c0_18] : memref<8x2xf32, #tpu.memory_space<vmem>>, vector<8x2xf32>
    tpu.vector_store %arg8[%c0_17, %c0_18], %22 {strides = array<i32>} : memref<8x2xf32, #tpu.memory_space<vmem>>, vector<8x2xf32>,
    return
  }
  func.func @transform_0(%arg0: i32) -> (i32, i32) {
    %c0_i32 = arith.constant 0 : i32
    %c0_i32_0 = arith.constant 0 : i32
    return %arg0, %c0_i32 : i32, i32
  }
  func.func @transform_1(%arg0: i32) -> (i32, i32) {
    %c0_i32 = arith.constant 0 : i32
    %c0_i32_0 = arith.constant 0 : i32
    %c0_i32_1 = arith.constant 0 : i32
    return %c0_i32, %c0_i32_0 : i32, i32
  }
  func.func @transform_2(%arg0: i32) -> (i32, i32) {
    %c0_i32 = arith.constant 0 : i32
    %c0_i32_0 = arith.constant 0 : i32
    %c0_i32_1 = arith.constant 0 : i32
    return %c0_i32, %c0_i32_0 : i32, i32
  }
  func.func @transform_3(%arg0: i32) -> (i32, i32) {
    %c0_i32 = arith.constant 0 : i32
    %c0_i32_0 = arith.constant 0 : i32
    %c0_i32_1 = arith.constant 0 : i32
    return %c0_i32, %c0_i32_0 : i32, i32
  }
  func.func @transform_4(%arg0: i32) -> (i32, i32) {
    %c0_i32 = arith.constant 0 : i32
    %c0_i32_0 = arith.constant 0 : i32
    %c0_i32_1 = arith.constant 0 : i32
    return %c0_i32, %c0_i32_0 : i32, i32
  }
  func.func @transform_5(%arg0: i32) -> (i32, i32) {
    %c0_i32 = arith.constant 0 : i32
    %c0_i32_0 = arith.constant 0 : i32
    %c0_i32_1 = arith.constant 0 : i32
    return %c0_i32, %c0_i32_0 : i32, i32
  }
  func.func @transform_6(%arg0: i32) -> (i32, i32) {
    %c0_i32 = arith.constant 0 : i32
    %c0_i32_0 = arith.constant 0 : i32
    return %arg0, %c0_i32 : i32, i32
  }
  func.func @transform_7(%arg0: i32) -> (i32, i32) {
    %c0_i32 = arith.constant 0 : i32
    %c0_i32_0 = arith.constant 0 : i32
    return %arg0, %c0_i32 : i32, i32
  }
}

module attributes {stable_mosaic.version = 11 : i64} {
  func.func @attn_mlp2_kernel(%arg0: i32, %arg1: i32, %arg2: memref<8x1xf32, #tpu.memory_space<vmem>>, %arg3: memref<1x8xf32, #tpu.memory_space<vmem>>, %arg4: memref<8x8xi8, #tpu.memory_space<vmem>>, %arg5: memref<8x16xbf16, #tpu.memory_space<vmem>>, %arg6: memref<16x16xbf16, #tpu.memory_space<vmem>>, %arg7: memref<1x16xf32, #tpu.memory_space<vmem>>, %arg8: memref<16x32xbf16, #tpu.memory_space<vmem>>, %arg9: memref<1x32xf32, #tpu.memory_space<vmem>>, %arg10: memref<8x32xf32, #tpu.memory_space<vmem>>, %arg11: memref<8x1xf32, #tpu.memory_space<vmem>>, %arg12: memref<8x1xf32, #tpu.memory_space<vmem>>, %arg13: memref<8x16xf32, #tpu.memory_space<vmem>>) attributes {dimension_semantics = [#tpu.dimension_semantics<parallel>, #tpu.dimension_semantics<arbitrary>], iteration_bounds = array<i64: 1, 1>, scalar_prefetch = 0 : i64, scratch_operands = 3 : i64, tpu.core_type = #tpu.core_type<tc>, window_params = [{transform_indices = @transform_0, window_bounds = array<i64: 8, 1>}, {transform_indices = @transform_1, window_bounds = array<i64: 1, 8>}, {transform_indices = @transform_2, window_bounds = array<i64: 8, 8>}, {transform_indices = @transform_3, window_bounds = array<i64: 8, 16>}, {pipeline_mode = #tpu.pipeline_mode<synchronous>, transform_indices = @transform_4, window_bounds = array<i64: 16, 16>}, {pipeline_mode = #tpu.pipeline_mode<synchronous>, transform_indices = @transform_5, window_bounds = array<i64: 1, 16>}, {pipeline_mode = #tpu.pipeline_mode<synchronous>, transform_indices = @transform_6, window_bounds = array<i64: 16, 32>}, {pipeline_mode = #tpu.pipeline_mode<synchronous>, transform_indices = @transform_7, window_bounds = array<i64: 1, 32>}, {transform_indices = @transform_8, window_bounds = array<i64: 8, 32>}]} {
    %c0_i32 = arith.constant 0 : i32
    %0 = arith.cmpi eq, %arg1, %c0_i32 : i32
    %1 = arith.extui %0 : i1 to i32
    %c0_i32_0 = arith.constant 0 : i32
    %2 = arith.cmpi ne, %1, %c0_i32_0 : i32
    scf.if %2 {
      %cst_27 = arith.constant 0xFF800000 : f32
      %43 = vector.broadcast %cst_27 : f32 to vector<8x1xf32>
      %c0_28 = arith.constant 0 : index
      %c0_29 = arith.constant 0 : index
      %44 = vector.load %arg11[%c0_28, %c0_29] : memref<8x1xf32, #tpu.memory_space<vmem>>, vector<8x1xf32>
      tpu.vector_store %arg11[%c0_28, %c0_29], %43 {strides = array<i32>} : memref<8x1xf32, #tpu.memory_space<vmem>>, vector<8x1xf32>,
      %cst_30 = arith.constant 0.000000e+00 : f32
      %45 = vector.broadcast %cst_30 : f32 to vector<8x1xf32>
      %c0_31 = arith.constant 0 : index
      %c0_32 = arith.constant 0 : index
      %46 = vector.load %arg12[%c0_31, %c0_32] : memref<8x1xf32, #tpu.memory_space<vmem>>, vector<8x1xf32>
      tpu.vector_store %arg12[%c0_31, %c0_32], %45 {strides = array<i32>} : memref<8x1xf32, #tpu.memory_space<vmem>>, vector<8x1xf32>,
      %cst_33 = arith.constant 0.000000e+00 : f32
      %47 = vector.broadcast %cst_33 : f32 to vector<8x16xf32>
      %c0_34 = arith.constant 0 : index
      %c0_35 = arith.constant 0 : index
      %48 = vector.load %arg13[%c0_34, %c0_35] : memref<8x16xf32, #tpu.memory_space<vmem>>, vector<8x16xf32>
      tpu.vector_store %arg13[%c0_34, %c0_35], %47 {strides = array<i32>} : memref<8x16xf32, #tpu.memory_space<vmem>>, vector<8x16xf32>,
    } else {
    }
    %c0 = arith.constant 0 : index
    %c0_1 = arith.constant 0 : index
    %3 = vector.load %arg2[%c0, %c0_1] : memref<8x1xf32, #tpu.memory_space<vmem>>, vector<8x1xf32>
    %c0_2 = arith.constant 0 : index
    %c0_3 = arith.constant 0 : index
    %4 = vector.load %arg3[%c0_2, %c0_3] : memref<1x8xf32, #tpu.memory_space<vmem>>, vector<1x8xf32>
    %5 = vector.broadcast %3 : vector<8x1xf32> to vector<8x8xf32>
    %6 = vector.broadcast %4 : vector<1x8xf32> to vector<8x8xf32>
    %7 = arith.addf %5, %6 : vector<8x8xf32>
    %cst = arith.constant 2.000000e-01 : f32
    %8 = vector.broadcast %cst : f32 to vector<8x8xf32>
    %9 = arith.mulf %8, %7 : vector<8x8xf32>
    %10 = arith.maximumf %7, %9 : vector<8x8xf32>
    %c0_4 = arith.constant 0 : index
    %c0_5 = arith.constant 0 : index
    %11 = vector.load %arg11[%c0_4, %c0_5] : memref<8x1xf32, #tpu.memory_space<vmem>>, vector<8x1xf32>
    %cst_6 = arith.constant dense<0xFF800000> : vector<8xf32>
    %12 = vector.multi_reduction <maximumf>, %10, %cst_6 [1] : vector<8x8xf32> to vector<8xf32>
    %13 = vector.shape_cast %12 : vector<8xf32> to vector<8x1xf32>
    %14 = arith.maximumf %11, %13 : vector<8x1xf32>
    %c0_7 = arith.constant 0 : index
    %c0_8 = arith.constant 0 : index
    %15 = vector.load %arg11[%c0_7, %c0_8] : memref<8x1xf32, #tpu.memory_space<vmem>>, vector<8x1xf32>
    %16 = arith.subf %15, %14 : vector<8x1xf32>
    %17 = math.exp %16 : vector<8x1xf32>
    %18 = vector.broadcast %14 : vector<8x1xf32> to vector<8x8xf32>
    %19 = arith.subf %10, %18 : vector<8x8xf32>
    %20 = arith.truncf %19 : vector<8x8xf32> to vector<8x8xbf16>
    %21 = math.exp %20 : vector<8x8xbf16>
    %c0_9 = arith.constant 0 : index
    %c0_10 = arith.constant 0 : index
    %22 = vector.load %arg4[%c0_9, %c0_10] : memref<8x8xi8, #tpu.memory_space<vmem>>, vector<8x8xi8>
    %23 = arith.sitofp %22 : vector<8x8xi8> to vector<8x8xbf16>
    %24 = arith.mulf %21, %23 : vector<8x8xbf16>
    %c0_11 = arith.constant 0 : index
    %c0_12 = arith.constant 0 : index
    %25 = vector.load %arg12[%c0_11, %c0_12] : memref<8x1xf32, #tpu.memory_space<vmem>>, vector<8x1xf32>
    %26 = arith.mulf %17, %25 : vector<8x1xf32>
    %27 = arith.extf %24 : vector<8x8xbf16> to vector<8x8xf32>
    %cst_13 = arith.constant dense<0.000000e+00> : vector<8xf32>
    %28 = vector.multi_reduction <add>, %27, %cst_13 [1] : vector<8x8xf32> to vector<8xf32>
    %29 = vector.shape_cast %28 : vector<8xf32> to vector<8x1xf32>
    %30 = arith.addf %26, %29 : vector<8x1xf32>
    %c0_14 = arith.constant 0 : index
    %c0_15 = arith.constant 0 : index
    %31 = vector.load %arg12[%c0_14, %c0_15] : memref<8x1xf32, #tpu.memory_space<vmem>>, vector<8x1xf32>
    tpu.vector_store %arg12[%c0_14, %c0_15], %30 {strides = array<i32>} : memref<8x1xf32, #tpu.memory_space<vmem>>, vector<8x1xf32>,
    %c0_16 = arith.constant 0 : index
    %c0_17 = arith.constant 0 : index
    %32 = vector.load %arg13[%c0_16, %c0_17] : memref<8x16xf32, #tpu.memory_space<vmem>>, vector<8x16xf32>
    %33 = vector.broadcast %17 : vector<8x1xf32> to vector<8x16xf32>
    %34 = arith.mulf %33, %32 : vector<8x16xf32>
    %c0_18 = arith.constant 0 : index
    %c0_19 = arith.constant 0 : index
    %35 = vector.load %arg5[%c0_18, %c0_19] : memref<8x16xbf16, #tpu.memory_space<vmem>>, vector<8x16xbf16>
    %cst_20 = arith.constant dense<0.000000e+00> : vector<8x16xf32>
    %36 = tpu.matmul %24, %35, %cst_20 {dimension_numbers = #tpu.dot_dimension_numbers<[1], [0], [0], [1], [0, 0, 1, 1], [], []>} : vector<8x8xbf16>, vector<8x16xbf16>, vector<8x16xf32> -> vector<8x16xf32>
    %37 = arith.addf %34, %36 : vector<8x16xf32>
    %c0_21 = arith.constant 0 : index
    %c0_22 = arith.constant 0 : index
    %38 = vector.load %arg13[%c0_21, %c0_22] : memref<8x16xf32, #tpu.memory_space<vmem>>, vector<8x16xf32>
    tpu.vector_store %arg13[%c0_21, %c0_22], %37 {strides = array<i32>} : memref<8x16xf32, #tpu.memory_space<vmem>>, vector<8x16xf32>,
    %c0_23 = arith.constant 0 : index
    %c0_24 = arith.constant 0 : index
    %39 = vector.load %arg11[%c0_23, %c0_24] : memref<8x1xf32, #tpu.memory_space<vmem>>, vector<8x1xf32>
    tpu.vector_store %arg11[%c0_23, %c0_24], %14 {strides = array<i32>} : memref<8x1xf32, #tpu.memory_space<vmem>>, vector<8x1xf32>,
    %c0_i32_25 = arith.constant 0 : i32
    %40 = arith.cmpi eq, %arg1, %c0_i32_25 : i32
    %41 = arith.extui %40 : i1 to i32
    %c0_i32_26 = arith.constant 0 : i32
    %42 = arith.cmpi ne, %41, %c0_i32_26 : i32
    scf.if %42 {
      %c0_27 = arith.constant 0 : index
      %c0_28 = arith.constant 0 : index
      %43 = vector.load %arg12[%c0_27, %c0_28] : memref<8x1xf32, #tpu.memory_space<vmem>>, vector<8x1xf32>
      %cst_29 = arith.constant 1.000000e-30 : f32
      %44 = vector.broadcast %cst_29 : f32 to vector<8x1xf32>
      %45 = arith.maximumf %43, %44 : vector<8x1xf32>
      %46 = tpu.reciprocal %45 {approx = true} : vector<8x1xf32> -> vector<8x1xf32>
      %c0_30 = arith.constant 0 : index
      %c0_31 = arith.constant 0 : index
      %47 = vector.load %arg13[%c0_30, %c0_31] : memref<8x16xf32, #tpu.memory_space<vmem>>, vector<8x16xf32>
      %48 = vector.broadcast %46 : vector<8x1xf32> to vector<8x16xf32>
      %49 = arith.mulf %47, %48 : vector<8x16xf32>
      %cst_32 = arith.constant 0.000000e+00 : f32
      %50 = vector.broadcast %cst_32 : f32 to vector<8x16xf32>
      %51 = arith.cmpf ogt, %49, %50 : vector<8x16xf32>
      %cst_33 = arith.constant 0.000000e+00 : f32
      %52 = vector.broadcast %cst_33 : f32 to vector<8x16xf32>
      %53 = arith.minimumf %49, %52 : vector<8x16xf32>
      %54 = math.exp %53 : vector<8x16xf32>
      %cst_34 = arith.constant 1.000000e+00 : f32
      %55 = vector.broadcast %cst_34 : f32 to vector<8x16xf32>
      %56 = arith.subf %54, %55 : vector<8x16xf32>
      %57 = arith.select %51, %49, %56 : vector<8x16xi1>, vector<8x16xf32>
      %58 = arith.truncf %57 : vector<8x16xf32> to vector<8x16xbf16>
      %c0_35 = arith.constant 0 : index
      %c0_36 = arith.constant 0 : index
      %59 = vector.load %arg6[%c0_35, %c0_36] : memref<16x16xbf16, #tpu.memory_space<vmem>>, vector<16x16xbf16>
      %cst_37 = arith.constant dense<0.000000e+00> : vector<8x16xf32>
      %60 = tpu.matmul %58, %59, %cst_37 {dimension_numbers = #tpu.dot_dimension_numbers<[1], [0], [0], [1], [0, 0, 1, 1], [], []>} : vector<8x16xbf16>, vector<16x16xbf16>, vector<8x16xf32> -> vector<8x16xf32>
      %c0_38 = arith.constant 0 : index
      %c0_39 = arith.constant 0 : index
      %61 = vector.load %arg7[%c0_38, %c0_39] : memref<1x16xf32, #tpu.memory_space<vmem>>, vector<1x16xf32>
      %62 = vector.broadcast %61 : vector<1x16xf32> to vector<8x16xf32>
      %63 = arith.addf %60, %62 : vector<8x16xf32>
      %cst_40 = arith.constant 0.000000e+00 : f32
      %64 = vector.broadcast %cst_40 : f32 to vector<8x16xf32>
      %65 = arith.maximumf %63, %64 : vector<8x16xf32>
      %66 = arith.truncf %65 : vector<8x16xf32> to vector<8x16xbf16>
      %c0_41 = arith.constant 0 : index
      %c0_42 = arith.constant 0 : index
      %67 = vector.load %arg8[%c0_41, %c0_42] : memref<16x32xbf16, #tpu.memory_space<vmem>>, vector<16x32xbf16>
      %cst_43 = arith.constant dense<0.000000e+00> : vector<8x32xf32>
      %68 = tpu.matmul %66, %67, %cst_43 {dimension_numbers = #tpu.dot_dimension_numbers<[1], [0], [0], [1], [0, 0, 1, 1], [], []>} : vector<8x16xbf16>, vector<16x32xbf16>, vector<8x32xf32> -> vector<8x32xf32>
      %c0_44 = arith.constant 0 : index
      %c0_45 = arith.constant 0 : index
      %69 = vector.load %arg9[%c0_44, %c0_45] : memref<1x32xf32, #tpu.memory_space<vmem>>, vector<1x32xf32>
      %70 = vector.broadcast %69 : vector<1x32xf32> to vector<8x32xf32>
      %71 = arith.addf %68, %70 : vector<8x32xf32>
      %cst_46 = arith.constant 0.000000e+00 : f32
      %72 = vector.broadcast %cst_46 : f32 to vector<8x32xf32>
      %73 = arith.maximumf %71, %72 : vector<8x32xf32>
      %c0_47 = arith.constant 0 : index
      %c0_48 = arith.constant 0 : index
      %74 = vector.load %arg10[%c0_47, %c0_48] : memref<8x32xf32, #tpu.memory_space<vmem>>, vector<8x32xf32>
      tpu.vector_store %arg10[%c0_47, %c0_48], %73 {strides = array<i32>} : memref<8x32xf32, #tpu.memory_space<vmem>>, vector<8x32xf32>,
    } else {
    }
    return
  }
  func.func @transform_0(%arg0: i32, %arg1: i32) -> (i32, i32) {
    %c0_i32 = arith.constant 0 : i32
    %c0_i32_0 = arith.constant 0 : i32
    return %arg0, %c0_i32 : i32, i32
  }
  func.func @transform_1(%arg0: i32, %arg1: i32) -> (i32, i32) {
    %c0_i32 = arith.constant 0 : i32
    %c0_i32_0 = arith.constant 0 : i32
    return %c0_i32, %arg1 : i32, i32
  }
  func.func @transform_2(%arg0: i32, %arg1: i32) -> (i32, i32) {
    %c0_i32 = arith.constant 0 : i32
    return %arg0, %arg1 : i32, i32
  }
  func.func @transform_3(%arg0: i32, %arg1: i32) -> (i32, i32) {
    %c0_i32 = arith.constant 0 : i32
    %c0_i32_0 = arith.constant 0 : i32
    return %arg1, %c0_i32 : i32, i32
  }
  func.func @transform_4(%arg0: i32, %arg1: i32) -> (i32, i32) {
    %c0_i32 = arith.constant 0 : i32
    %c0_i32_0 = arith.constant 0 : i32
    %c0_i32_1 = arith.constant 0 : i32
    return %c0_i32, %c0_i32_0 : i32, i32
  }
  func.func @transform_5(%arg0: i32, %arg1: i32) -> (i32, i32) {
    %c0_i32 = arith.constant 0 : i32
    %c0_i32_0 = arith.constant 0 : i32
    %c0_i32_1 = arith.constant 0 : i32
    return %c0_i32, %c0_i32_0 : i32, i32
  }
  func.func @transform_6(%arg0: i32, %arg1: i32) -> (i32, i32) {
    %c0_i32 = arith.constant 0 : i32
    %c0_i32_0 = arith.constant 0 : i32
    %c0_i32_1 = arith.constant 0 : i32
    return %c0_i32, %c0_i32_0 : i32, i32
  }
  func.func @transform_7(%arg0: i32, %arg1: i32) -> (i32, i32) {
    %c0_i32 = arith.constant 0 : i32
    %c0_i32_0 = arith.constant 0 : i32
    %c0_i32_1 = arith.constant 0 : i32
    return %c0_i32, %c0_i32_0 : i32, i32
  }
  func.func @transform_8(%arg0: i32, %arg1: i32) -> (i32, i32) {
    %c0_i32 = arith.constant 0 : i32
    %c0_i32_0 = arith.constant 0 : i32
    return %arg0, %c0_i32 : i32, i32
  }
}

</mosaic_0001>

<llo_original>
// kernel: resgat_encoder.2
$region0: #{resgat_encoder.2}
  #allocation0 [shape = 'u32[]', space=smem, size = 0x4, offset = 0x4, fixed_abs, tag = 'smem constant byte address 0x4 - core index']
  #allocation1 [shape = 'u32[144,128]{1,0:T(1,128)}', space=vmem, size = 0x12000, scoped, tag = 'internal scratch']
  %s0 = inlined_call_operand.vmem [shape: bf16[8,32], index: 0, kind: input, shape index: {}]
  %s1 = inlined_call_operand.vmem [shape: bf16[32,16], index: 1, kind: input, shape index: {}]
  %s2 = inlined_call_operand.vmem [shape: f32[1,16], index: 2, kind: input, shape index: {}]
  %s3 = inlined_call_operand.vmem [shape: bf16[16,16], index: 3, kind: input, shape index: {}]
  %s4 = inlined_call_operand.vmem [shape: f32[1,16], index: 4, kind: input, shape index: {}]
  %s5 = inlined_call_operand.vmem [shape: bf16[16,18], index: 5, kind: input, shape index: {}]
  %s6 = inlined_call_operand.vmem [shape: bf16[8,16], index: 6, kind: output, shape index: {0}]
  %s7 = inlined_call_operand.vmem [shape: f32[8,2], index: 7, kind: output, shape index: {1}]
  %8 = xla_tuple %s6, %s7
  %s9 = sld [smem:[#allocation0]]
  $region42: #{resgat_encoder.2} parent=0
    _
  %s11 = ssub.s32 1, %s9
  %s12 = scalar_select 0, %s11, %s9
  // Predicated region
  $region2: #{resgat_encoder.2} parent=0 // pred_check
    _
  $region3: #{resgat_encoder.2} parent=0 // pred_check_branch
    %14 = sbr.rel (0) target = $region5
  $region4: #{resgat_encoder.2} parent=0 // pred_region
    _
  $region5: #{resgat_encoder.2} parent=0 // pred_fallthru
    _
  // Predicated region
  $region6: #{resgat_encoder.2} parent=0 // pred_check
    _
  $region7: #{resgat_encoder.2} parent=0 // pred_check_branch
    %16 = sbr.rel (0) target = $region9
  $region8: #{resgat_encoder.2} parent=0 // pred_region
    _
  $region9: #{resgat_encoder.2} parent=0 // pred_fallthru
    _
  // Predicated region
  $region10: #{resgat_encoder.2} parent=0 // pred_check
    _
  $region11: #{resgat_encoder.2} parent=0 // pred_check_branch
    %18 = sbr.rel (0) target = $region13
  $region12: #{resgat_encoder.2} parent=0 // pred_region
    _
  $region13: #{resgat_encoder.2} parent=0 // pred_fallthru
    _
  // Predicated region
  $region14: #{resgat_encoder.2} parent=0 // pred_check
    _
  $region15: #{resgat_encoder.2} parent=0 // pred_check_branch
    %20 = sbr.rel (0) target = $region17
  $region16: #{resgat_encoder.2} parent=0 // pred_region
    _
  $region17: #{resgat_encoder.2} parent=0 // pred_fallthru
    _
  // Predicated region
  $region18: #{resgat_encoder.2} parent=0 // pred_check
    _
  $region19: #{resgat_encoder.2} parent=0 // pred_check_branch
    %22 = sbr.rel (0) target = $region21
  $region20: #{resgat_encoder.2} parent=0 // pred_region
    _
  $region21: #{resgat_encoder.2} parent=0 // pred_fallthru
    _
  // Predicated region
  $region22: #{resgat_encoder.2} parent=0 // pred_check
    _
  $region23: #{resgat_encoder.2} parent=0 // pred_check_branch
    %24 = sbr.rel (0) target = $region25
  $region24: #{resgat_encoder.2} parent=0 // pred_region
    _
  $region25: #{resgat_encoder.2} parent=0 // pred_fallthru
    _
  %v26 = vld [vmem:[%s0] sm:$0xf]
  %v27 = vld [vmem:[%s1] sm:$0xf]
  %v28 = vld [vmem:[%s1 + $0x4] sm:$0xf]
  %v29 = vld [vmem:[%s1 + $0x8] sm:$0xf]
  %v30 = vld [vmem:[%s1 + $0xc] sm:$0xf]
  %v31 = vld [vmem:[%s2] sm:$0x1]
  %v33 = vlaneseq
  %v34 = vshrl.u32 %v33, 7
  %v35 = vsub.s32 0, %v34
  %v36 = vrot.slane %v31, %v35
  %v42 = vunpack.c.l.b16 %v27
  %v43 = vunpack.c.l.b16 %v28
  %v44 = vunpack.c.l.b16 %v29
  %v45 = vunpack.c.l.b16 %v30
  %v46 = vpack.c.b16 %v43, %v42
  %v47 = vpack.c.b16 %v45, %v44
  %vm50 = vcmask 261120
  %v52 = vsel %vm50, %v26, 0
  %54 = vmatprep.subr.bf16.mxu0 0
  %55 = vmatpush1.bf16.msra.mxu0 %v46
  %56 = vmatprep.subr.bf16.mxu0 0
  %57 = vmatpush1.bf16.msra.mxu0 %v47
  %58 = vmatprep.subr.bf16.mxu0 0
  %59 = vmatpush1.bf16.msra.mxu0 0
  %60 = vmatprep.subr.bf16.mxu0 0
  %61 = vmatpush1.bf16.msra.mxu0 0
  %62 = vmatprep.subr.bf16.mxu0 0
  %63 = vmatpush1.bf16.msra.mxu0 0
  %64 = vmatprep.subr.bf16.mxu0 0
  %65 = vmatpush1.bf16.msra.mxu0 0
  %66 = vmatprep.subr.bf16.mxu0 0
  %67 = vmatpush1.bf16.msra.mxu0 0
  %68 = vmatprep.subr.bf16.mxu0 0
  %69 = vmatpush1.bf16.msra.mxu0 0
  %70 = vmatprep.subr.bf16.mxu0 0
  %71 = vmatpush1.bf16.msra.mxu0 0
  %72 = vmatprep.subr.bf16.mxu0 0
  %73 = vmatpush1.bf16.msra.mxu0 0
  %74 = vmatprep.subr.bf16.mxu0 0
  %75 = vmatpush1.bf16.msra.mxu0 0
  %76 = vmatprep.subr.bf16.mxu0 0
  %77 = vmatpush1.bf16.msra.mxu0 0
  %78 = vmatprep.subr.bf16.mxu0 0
  %79 = vmatpush1.bf16.msra.mxu0 0
  %80 = vmatprep.subr.bf16.mxu0 0
  %81 = vmatpush1.bf16.msra.mxu0 0
  %82 = vmatprep.subr.bf16.mxu0 0
  %83 = vmatpush1.bf16.msra.mxu0 0
  %84 = vmatprep.subr.bf16.mxu0 0
  %85 = vmatpush1.bf16.msra.mxu0 0
  %86 = vmatprep.mubr.bf16.mxu0 0
  %87 = vmatmul.mubr.bf16.gmra.mrb[0].mxu0 %v52
  %v88 = vpop.f32.mrb[0].mxu0
  %v89 = vadd.f32 %v36, %v88
  %v90 = vpop.f32.mrb[0].mxu0
  %v91 = vpop.f32.mrb[0].mxu0
  %v92 = vpop.f32.mrb[0].mxu0
  %93 = vdwg.mxu0
  %v94 = vmax.f32 %v89, 0.0
  %v95 = vpack.c.bf16 %v94, %v94
  %v96 = vld [vmem:[%s3] sm:$0xf]
  %v97 = vld [vmem:[%s3 + $0x4] sm:$0xf]
  %v98 = vld [vmem:[%s4] sm:$0x1]
  %v100 = vlaneseq
  %v101 = vshrl.u32 %v100, 7
  %v102 = vsub.s32 0, %v101
  %v103 = vrot.slane %v98, %v102
  %v107 = vunpack.c.l.b16 %v96
  %v108 = vunpack.c.l.b16 %v97
  %v109 = vpack.c.b16 %v108, %v107
  %vm111 = vcmask 130048
  %v113 = vsel %vm111, %v95, 0
  %115 = vmatprep.subr.bf16.mxu0 0
  %116 = vmatpush1.bf16.msra.mxu0 %v109
  %117 = vmatprep.subr.bf16.mxu0 0
  %118 = vmatpush1.bf16.msra.mxu0 0
  %119 = vmatprep.subr.bf16.mxu0 0
  %120 = vmatpush1.bf16.msra.mxu0 0
  %121 = vmatprep.subr.bf16.mxu0 0
  %122 = vmatpush1.bf16.msra.mxu0 0
  %123 = vmatprep.subr.bf16.mxu0 0
  %124 = vmatpush1.bf16.msra.mxu0 0
  %125 = vmatprep.subr.bf16.mxu0 0
  %126 = vmatpush1.bf16.msra.mxu0 0
  %127 = vmatprep.subr.bf16.mxu0 0
  %128 = vmatpush1.bf16.msra.mxu0 0
  %129 = vmatprep.subr.bf16.mxu0 0
  %130 = vmatpush1.bf16.msra.mxu0 0
  %131 = vmatprep.subr.bf16.mxu0 0
  %132 = vmatpush1.bf16.msra.mxu0 0
  %133 = vmatprep.subr.bf16.mxu0 0
  %134 = vmatpush1.bf16.msra.mxu0 0
  %135 = vmatprep.subr.bf16.mxu0 0
  %136 = vmatpush1.bf16.msra.mxu0 0
  %137 = vmatprep.subr.bf16.mxu0 0
  %138 = vmatpush1.bf16.msra.mxu0 0
  %139 = vmatprep.subr.bf16.mxu0 0
  %140 = vmatpush1.bf16.msra.mxu0 0
  %141 = vmatprep.subr.bf16.mxu0 0
  %142 = vmatpush1.bf16.msra.mxu0 0
  %143 = vmatprep.subr.bf16.mxu0 0
  %144 = vmatpush1.bf16.msra.mxu0 0
  %145 = vmatprep.subr.bf16.mxu0 0
  %146 = vmatpush1.bf16.msra.mxu0 0
  %147 = vmatprep.mubr.bf16.mxu0 0
  %148 = vmatmul.mubr.bf16.gmra.mrb[0].mxu0 %v113
  %v149 = vpop.f32.mrb[0].mxu0
  %v150 = vadd.f32 %v103, %v149
  %v151 = vpop.f32.mrb[0].mxu0
  %v152 = vpop.f32.mrb[0].mxu0
  %v153 = vpop.f32.mrb[0].mxu0
  %154 = vdwg.mxu0
  %v155 = vmax.f32 %v150, 0.0
  %v156 = vpack.c.bf16 %v155, %v155
  %v157 = vld [vmem:[%s5] sm:$0xf]
  %v158 = vld [vmem:[%s5 + $0x4] sm:$0xf]
  %v161 = vunpack.c.l.b16 %v157
  %v162 = vunpack.c.l.b16 %v158
  %v163 = vpack.c.b16 %v162, %v161
  %v166 = vsel %vm111, %v156, 0
  %168 = vmatprep.subr.bf16.mxu0 0
  %169 = vmatpush1.bf16.msra.mxu0 %v163
  %170 = vmatprep.subr.bf16.mxu0 0
  %171 = vmatpush1.bf16.msra.mxu0 0
  %172 = vmatprep.subr.bf16.mxu0 0
  %173 = vmatpush1.bf16.msra.mxu0 0
  %174 = vmatprep.subr.bf16.mxu0 0
  %175 = vmatpush1.bf16.msra.mxu0 0
  %176 = vmatprep.subr.bf16.mxu0 0
  %177 = vmatpush1.bf16.msra.mxu0 0
  %178 = vmatprep.subr.bf16.mxu0 0
  %179 = vmatpush1.bf16.msra.mxu0 0
  %180 = vmatprep.subr.bf16.mxu0 0
  %181 = vmatpush1.bf16.msra.mxu0 0
  %182 = vmatprep.subr.bf16.mxu0 0
  %183 = vmatpush1.bf16.msra.mxu0 0
  %184 = vmatprep.subr.bf16.mxu0 0
  %185 = vmatpush1.bf16.msra.mxu0 0
  %186 = vmatprep.subr.bf16.mxu0 0
  %187 = vmatpush1.bf16.msra.mxu0 0
  %188 = vmatprep.subr.bf16.mxu0 0
  %189 = vmatpush1.bf16.msra.mxu0 0
  %190 = vmatprep.subr.bf16.mxu0 0
  %191 = vmatpush1.bf16.msra.mxu0 0
  %192 = vmatprep.subr.bf16.mxu0 0
  %193 = vmatpush1.bf16.msra.mxu0 0
  %194 = vmatprep.subr.bf16.mxu0 0
  %195 = vmatpush1.bf16.msra.mxu0 0
  %196 = vmatprep.subr.bf16.mxu0 0
  %197 = vmatpush1.bf16.msra.mxu0 0
  %198 = vmatprep.subr.bf16.mxu0 0
  %199 = vmatpush1.bf16.msra.mxu0 0
  %200 = vmatprep.mubr.bf16.mxu0 0
  %201 = vmatmul.mubr.bf16.gmra.mrb[0].mxu0 %v166
  %v202 = vpop.f32.mrb[0].mxu0
  %v203 = vadd.f32 0.0, %v202
  %v204 = vpop.f32.mrb[0].mxu0
  %v205 = vpop.f32.mrb[0].mxu0
  %v206 = vpop.f32.mrb[0].mxu0
  %207 = vdwg.mxu0
  %v208 = vpack.c.bf16 %v203, %v203
  %vm209 = vcmask 125952
  %210 = vst.msk [vmem:[%s6] sm:$0xf] %vm209, %v208
  %212 = vrot.lane.b32.xlu0 %v203, 112
  %v213 = vpop.permute.xlu0 %212
  %vm215 = vcmask 15360
  %216 = vst.msk [vmem:[%s7] sm:$0xff] %vm215, %v213
  // Predicated region
  $region26: #{resgat_encoder.2} parent=0 // pred_check
    _
  $region27: #{resgat_encoder.2} parent=0 // pred_check_branch
    %218 = sbr.rel (0) target = $region29
  $region28: #{resgat_encoder.2} parent=0 // pred_region
    _
  $region29: #{resgat_encoder.2} parent=0 // pred_fallthru
    _
  // Predicated region
  $region30: #{resgat_encoder.2} parent=0 // pred_check
    _
  $region31: #{resgat_encoder.2} parent=0 // pred_check_branch
    %220 = sbr.rel (0) target = $region33
  $region32: #{resgat_encoder.2} parent=0 // pred_region
    _
  $region33: #{resgat_encoder.2} parent=0 // pred_fallthru
    _
  // Predicated region
  $region34: #{resgat_encoder.2} parent=0 // pred_check
    _
  $region35: #{resgat_encoder.2} parent=0 // pred_check_branch
    %222 = sbr.rel (0) target = $region37
  $region36: #{resgat_encoder.2} parent=0 // pred_region
    _
  $region37: #{resgat_encoder.2} parent=0 // pred_fallthru
    _
  // Predicated region
  $region38: #{resgat_encoder.2} parent=0 // pred_check
    _
  $region39: #{resgat_encoder.2} parent=0 // pred_check_branch
    %224 = sbr.rel (0) target = $region41
  $region40: #{resgat_encoder.2} parent=0 // pred_region
    _
  $region41: #{resgat_encoder.2} parent=0 // pred_fallthru
    _

// kernel: resgat_encoder.3
$region0: #{resgat_encoder.3}
  #allocation0 [shape = 'u32[]', space=smem, size = 0x4, offset = 0x4, fixed_abs, tag = 'smem constant byte address 0x4 - core index']
  #allocation1 [shape = 'u32[144,128]{1,0:T(1,128)}', space=vmem, size = 0x12000, scoped, tag = 'internal scratch']
  #allocation2 [shape = 'f32[8,1]{1,0:T(8,128)}', space=vmem, size = 0x1000, scoped, tag = 'scratch operand']
  #allocation3 [shape = 'f32[8,1]{1,0:T(8,128)}', space=vmem, size = 0x1000, scoped, tag = 'scratch operand']
  #allocation4 [shape = 'f32[8,16]{1,0:T(8,128)}', space=vmem, size = 0x1000, scoped, tag = 'scratch operand']
  %s0 = inlined_call_operand.vmem [shape: f32[8,1], index: 0, kind: input, shape index: {}]
  %s1 = inlined_call_operand.vmem [shape: f32[1,8], index: 1, kind: input, shape index: {}]
  %s2 = inlined_call_operand.vmem [shape: s8[8,8], index: 2, kind: input, shape index: {}]
  %s3 = inlined_call_operand.vmem [shape: bf16[8,16], index: 3, kind: input, shape index: {}]
  %s4 = inlined_call_operand.vmem [shape: bf16[16,16], index: 4, kind: input, shape index: {}]
  %s5 = inlined_call_operand.vmem [shape: f32[1,16], index: 5, kind: input, shape index: {}]
  %s6 = inlined_call_operand.vmem [shape: bf16[16,32], index: 6, kind: input, shape index: {}]
  %s7 = inlined_call_operand.vmem [shape: f32[1,32], index: 7, kind: input, shape index: {}]
  %s8 = inlined_call_operand.hbm [shape: f32[8,32], index: 8, kind: output, shape index: {}]
  %s9 = sld [smem:[#allocation0]]
  $region50: #{resgat_encoder.3} parent=0
    _
  %s11 = ssub.s32 1, %s9
  %s12 = scalar_select 0, %s11, %s9
  $region1: #{resgat_encoder.3} parent=0
    #allocation5 [shape = 'u8[4096]{0}', space=vmem, size = 0x1000, scoped, tag = 'output window, operand 0, single buffered']
    #allocation6 [shape = 's32[1]{0}', space=sflag, size = 0x4, scoped, tag = 'scoped memory for resgat_encoder.3']
    %13 = vsyncpa [#allocation6], 0
    // Predicated region
    $region2: #{resgat_encoder.3} parent=1 // pred_check
      _
    $region3: #{resgat_encoder.3} parent=1 // pred_check_branch
      %15 = sbr.rel (0) target = $region5
    $region4: #{resgat_encoder.3} parent=1 // pred_region
      _
    $region5: #{resgat_encoder.3} parent=1 // pred_fallthru
      _
    // Predicated region
    $region6: #{resgat_encoder.3} parent=1 // pred_check
      _
    $region7: #{resgat_encoder.3} parent=1 // pred_check_branch
      %17 = sbr.rel (0) target = $region9
    $region8: #{resgat_encoder.3} parent=1 // pred_region
      _
    $region9: #{resgat_encoder.3} parent=1 // pred_fallthru
      _
    // Predicated region
    $region10: #{resgat_encoder.3} parent=1 // pred_check
      _
    $region11: #{resgat_encoder.3} parent=1 // pred_check_branch
      %19 = sbr.rel (0) target = $region13
    $region12: #{resgat_encoder.3} parent=1 // pred_region
      _
    $region13: #{resgat_encoder.3} parent=1 // pred_fallthru
      _
    // Predicated region
    $region14: #{resgat_encoder.3} parent=1 // pred_check
      _
    $region15: #{resgat_encoder.3} parent=1 // pred_check_branch
      %21 = sbr.rel (0) target = $region17
    $region16: #{resgat_encoder.3} parent=1 // pred_region
      _
    $region17: #{resgat_encoder.3} parent=1 // pred_fallthru
      _
    // Predicated region
    $region18: #{resgat_encoder.3} parent=1 // pred_check
      _
    $region19: #{resgat_encoder.3} parent=1 // pred_check_branch
      %23 = sbr.rel (0) target = $region21
    $region20: #{resgat_encoder.3} parent=1 // pred_region
      _
    $region21: #{resgat_encoder.3} parent=1 // pred_fallthru
      _
    // Predicated region
    $region22: #{resgat_encoder.3} parent=1 // pred_check
      _
    $region23: #{resgat_encoder.3} parent=1 // pred_check_branch
      %25 = sbr.rel (0) target = $region25
    $region24: #{resgat_encoder.3} parent=1 // pred_region
      _
    $region25: #{resgat_encoder.3} parent=1 // pred_fallthru
      _
    // Predicated region
    $region26: #{resgat_encoder.3} parent=1 // pred_check
      _
    $region27: #{resgat_encoder.3} parent=1 // pred_check_branch
      %27 = sbr.rel (0) target = $region29
    $region28: #{resgat_encoder.3} parent=1 // pred_region
      _
    $region29: #{resgat_encoder.3} parent=1 // pred_fallthru
      _
    // Predicated region
    $region30: #{resgat_encoder.3} parent=1 // pred_check
      _
    $region31: #{resgat_encoder.3} parent=1 // pred_check_branch
      %29 = sbr.rel (0) target = $region33
    $region32: #{resgat_encoder.3} parent=1 // pred_region
      _
    $region33: #{resgat_encoder.3} parent=1 // pred_fallthru
      _
    %p31 = scmp.eq.s32.totalorder 0, 0
    // Predicated region
    $region34: #{resgat_encoder.3} parent=1 // pred_check
      %p32 = pneg %p31
    $region35: #{resgat_encoder.3} parent=1 // pred_check_branch
      %34 = sbr.rel (%p32) target = $region37
    $region36: #{resgat_encoder.3} parent=1 // pred_region
      %vm35 = vcmask 7168
      %36 = vst.msk [vmem:[#allocation2] sm:$0xff] %vm35, -inf
      %37 = vst.msk [vmem:[#allocation3] sm:$0xff] %vm35, 0.0
      %vm38 = vcmask 130048
      %39 = vst.msk [vmem:[#allocation4] sm:$0xff] %vm38, 0.0
    $region37: #{resgat_encoder.3} parent=1 // pred_fallthru
      _
    %v40 = vld [vmem:[%s0] sm:$0xff]
    %v41 = vld [vmem:[%s1] sm:$0x1]
    %43 = vset.pattern.permute.xlu0 0
    %44 = vperm.xlu0 %43, %v40
    %v45 = vpop.permute.xlu0 %44
    %v48 = vlaneseq
    %v49 = vshrl.u32 %v48, 7
    %v50 = vsub.s32 0, %v49
    %v51 = vrot.slane %v41, %v50
    %v53 = vadd.f32 %v45, %v51
    %v54 = vmul.f32 %v53, 0.2
    %v55 = vmax.f32 %v53, %v54
    %v56 = vld [vmem:[#allocation2] sm:$0xff]
    %vm57 = vcmask 64512
    %v58 = vsel %vm57, %v55, -inf
    %59 = vmax.xlane.f32.xlu0 %v58
    %v60 = vpop.xlane.xlu0 %59
    %v61 = vmax.f32 %v56, %v60
    %v62 = vsub.f32 %v56, %v61
    %v63 = vmul.f32 %v62, 1.442695
    %v64 = vpow.pop %v63
    %66 = vset.pattern.permute.xlu0 0
    %67 = vperm.xlu0 %66, %v61
    %v68 = vpop.permute.xlu0 %67
    %v70 = vsub.f32 %v55, %v68
    %v71 = vpack.c.bf16 %v70, %v70
    %v73 = vmul.bf16 %v71, 1069105081
    %v74 = vpow.bf16.pop %v73
    %v75 = vld [vmem:[%s2] sm:$0x3]
    %v76 = vunpack.c.l.s8.bf16 %v75
    %v77 = vmul.bf16 %v74, %v76
    %v78 = vld [vmem:[#allocation3] sm:$0xff]
    %v79 = vmul.f32 %v64, %v78
    %v80 = vunpack.c.l.bf16 %v77
    %v81 = vsel %vm57, %v80, 0.0
    %82 = vadd.xlane.f32.xlu0 %v81
    %v83 = vpop.xlane.xlu0 %82
    %v84 = vadd.f32 %v79, %v83
    %vm85 = vcmask 7168
    %86 = vst.msk [vmem:[#allocation3] sm:$0xff] %vm85, %v84
    %v87 = vld [vmem:[#allocation4] sm:$0xff]
    %89 = vset.pattern.permute.xlu0 0
    %90 = vperm.xlu0 %89, %v64
    %v91 = vpop.permute.xlu0 %90
    %v93 = vmul.f32 %v91, %v87
    %v94 = vld [vmem:[%s3] sm:$0xf]
    %v96 = vsel %vm57, %v77, 0
    %vm98 = vcmask 1043456
    %v100 = vsel %vm98, %v94, 0
    %102 = vmatprep.subr.bf16.mxu0 0
    %103 = vmatpush1.bf16.msra.mxu0 %v100
    %104 = vmatprep.subr.bf16.mxu0 0
    %105 = vmatpush1.bf16.msra.mxu0 0
    %106 = vmatprep.subr.bf16.mxu0 0
    %107 = vmatpush1.bf16.msra.mxu0 0
    %108 = vmatprep.subr.bf16.mxu0 0
    %109 = vmatpush1.bf16.msra.mxu0 0
    %110 = vmatprep.subr.bf16.mxu0 0
    %111 = vmatpush1.bf16.msra.mxu0 0
    %112 = vmatprep.subr.bf16.mxu0 0
    %113 = vmatpush1.bf16.msra.mxu0 0
    %114 = vmatprep.subr.bf16.mxu0 0
    %115 = vmatpush1.bf16.msra.mxu0 0
    %116 = vmatprep.subr.bf16.mxu0 0
    %117 = vmatpush1.bf16.msra.mxu0 0
    %118 = vmatprep.subr.bf16.mxu0 0
    %119 = vmatpush1.bf16.msra.mxu0 0
    %120 = vmatprep.subr.bf16.mxu0 0
    %121 = vmatpush1.bf16.msra.mxu0 0
    %122 = vmatprep.subr.bf16.mxu0 0
    %123 = vmatpush1.bf16.msra.mxu0 0
    %124 = vmatprep.subr.bf16.mxu0 0
    %125 = vmatpush1.bf16.msra.mxu0 0
    %126 = vmatprep.subr.bf16.mxu0 0
    %127 = vmatpush1.bf16.msra.mxu0 0
    %128 = vmatprep.subr.bf16.mxu0 0
    %129 = vmatpush1.bf16.msra.mxu0 0
    %130 = vmatprep.subr.bf16.mxu0 0
    %131 = vmatpush1.bf16.msra.mxu0 0
    %132 = vmatprep.subr.bf16.mxu0 0
    %133 = vmatpush1.bf16.msra.mxu0 0
    %134 = vmatprep.mubr.bf16.mxu0 0
    %135 = vmatmul.mubr.bf16.gmra.mrb[0].mxu0 %v96
    %v136 = vpop.f32.mrb[0].mxu0
    %v137 = vadd.f32 0.0, %v136
    %v138 = vpop.f32.mrb[0].mxu0
    %v139 = vpop.f32.mrb[0].mxu0
    %v140 = vpop.f32.mrb[0].mxu0
    %141 = vdwg.mxu0
    %v142 = vadd.f32 %v93, %v137
    %vm143 = vcmask 130048
    %144 = vst.msk [vmem:[#allocation4] sm:$0xff] %vm143, %v142
    %145 = vst.msk [vmem:[#allocation2] sm:$0xff] %vm85, %v61
    // Predicated region
    $region38: #{resgat_encoder.3} parent=1 // pred_check
      %p146 = pneg %p31
    $region39: #{resgat_encoder.3} parent=1 // pred_check_branch
      %148 = sbr.rel (%p146) target = $region41
    $region40: #{resgat_encoder.3} parent=1 // pred_region
      %v149 = vld [vmem:[#allocation3] sm:$0xff]
      %v150 = vmax.f32 %v149, 1e-30
      %v151 = vrcp.pop %v150
      %v152 = vld [vmem:[#allocation4] sm:$0xff]
      %154 = vset.pattern.permute.xlu0 0
      %155 = vperm.xlu0 %154, %v151
      %v156 = vpop.permute.xlu0 %155
      %v158 = vmul.f32 %v152, %v156
      %vm159 = vcmp.gt.f32.partialorder %v158, 0.0
      %v160 = vmin.f32 %v158, 0.0
      %v161 = vmul.f32 %v160, 1.442695
      %v162 = vpow.pop %v161
      %v163 = vsub.f32 %v162, 1.0
      %v164 = vsel %vm159, %v158, %v163
      %v165 = vpack.c.bf16 %v164, %v164
      %v166 = vld [vmem:[%s4] sm:$0xf]
      %v167 = vld [vmem:[%s4 + $0x4] sm:$0xf]
      %v168 = vld [vmem:[%s5] sm:$0x1]
      %v170 = vlaneseq
      %v171 = vshrl.u32 %v170, 7
      %v172 = vsub.s32 0, %v171
      %v173 = vrot.slane %v168, %v172
      %v177 = vunpack.c.l.b16 %v166
      %v178 = vunpack.c.l.b16 %v167
      %v179 = vpack.c.b16 %v178, %v177
      %v182 = vsel %vm143, %v165, 0
      %184 = vmatprep.subr.bf16.mxu0 0
      %185 = vmatpush1.bf16.msra.mxu0 %v179
      %186 = vmatprep.subr.bf16.mxu0 0
      %187 = vmatpush1.bf16.msra.mxu0 0
      %188 = vmatprep.subr.bf16.mxu0 0
      %189 = vmatpush1.bf16.msra.mxu0 0
      %190 = vmatprep.subr.bf16.mxu0 0
      %191 = vmatpush1.bf16.msra.mxu0 0
      %192 = vmatprep.subr.bf16.mxu0 0
      %193 = vmatpush1.bf16.msra.mxu0 0
      %194 = vmatprep.subr.bf16.mxu0 0
      %195 = vmatpush1.bf16.msra.mxu0 0
      %196 = vmatprep.subr.bf16.mxu0 0
      %197 = vmatpush1.bf16.msra.mxu0 0
      %198 = vmatprep.subr.bf16.mxu0 0
      %199 = vmatpush1.bf16.msra.mxu0 0
      %200 = vmatprep.subr.bf16.mxu0 0
      %201 = vmatpush1.bf16.msra.mxu0 0
      %202 = vmatprep.subr.bf16.mxu0 0
      %203 = vmatpush1.bf16.msra.mxu0 0
      %204 = vmatprep.subr.bf16.mxu0 0
      %205 = vmatpush1.bf16.msra.mxu0 0
      %206 = vmatprep.subr.bf16.mxu0 0
      %207 = vmatpush1.bf16.msra.mxu0 0
      %208 = vmatprep.subr.bf16.mxu0 0
      %209 = vmatpush1.bf16.msra.mxu0 0
      %210 = vmatprep.subr.bf16.mxu0 0
      %211 = vmatpush1.bf16.msra.mxu0 0
      %212 = vmatprep.subr.bf16.mxu0 0
      %213 = vmatpush1.bf16.msra.mxu0 0
      %214 = vmatprep.subr.bf16.mxu0 0
      %215 = vmatpush1.bf16.msra.mxu0 0
      %216 = vmatprep.mubr.bf16.mxu0 0
      %217 = vmatmul.mubr.bf16.gmra.mrb[0].mxu0 %v182
      %v218 = vpop.f32.mrb[0].mxu0
      %v219 = vadd.f32 %v173, %v218
      %v220 = vpop.f32.mrb[0].mxu0
      %v221 = vpop.f32.mrb[0].mxu0
      %v222 = vpop.f32.mrb[0].mxu0
      %223 = vdwg.mxu0
      %v224 = vmax.f32 %v219, 0.0
      %v225 = vpack.c.bf16 %v224, %v224
      %v226 = vld [vmem:[%s6] sm:$0xf]
      %v227 = vld [vmem:[%s6 + $0x4] sm:$0xf]
      %v228 = vld [vmem:[%s7] sm:$0x1]
      %v230 = vlaneseq
      %v231 = vshrl.u32 %v230, 7
      %v232 = vsub.s32 0, %v231
      %v233 = vrot.slane %v228, %v232
      %v237 = vunpack.c.l.b16 %v226
      %v238 = vunpack.c.l.b16 %v227
      %v239 = vpack.c.b16 %v238, %v237
      %v242 = vsel %vm143, %v225, 0
      %244 = vmatprep.subr.bf16.mxu0 0
      %245 = vmatpush1.bf16.msra.mxu0 %v239
      %246 = vmatprep.subr.bf16.mxu0 0
      %247 = vmatpush1.bf16.msra.mxu0 0
      %248 = vmatprep.subr.bf16.mxu0 0
      %249 = vmatpush1.bf16.msra.mxu0 0
      %250 = vmatprep.subr.bf16.mxu0 0
      %251 = vmatpush1.bf16.msra.mxu0 0
      %252 = vmatprep.subr.bf16.mxu0 0
      %253 = vmatpush1.bf16.msra.mxu0 0
      %254 = vmatprep.subr.bf16.mxu0 0
      %255 = vmatpush1.bf16.msra.mxu0 0
      %256 = vmatprep.subr.bf16.mxu0 0
      %257 = vmatpush1.bf16.msra.mxu0 0
      %258 = vmatprep.subr.bf16.mxu0 0
      %259 = vmatpush1.bf16.msra.mxu0 0
      %260 = vmatprep.subr.bf16.mxu0 0
      %261 = vmatpush1.bf16.msra.mxu0 0
      %262 = vmatprep.subr.bf16.mxu0 0
      %263 = vmatpush1.bf16.msra.mxu0 0
      %264 = vmatprep.subr.bf16.mxu0 0
      %265 = vmatpush1.bf16.msra.mxu0 0
      %266 = vmatprep.subr.bf16.mxu0 0
      %267 = vmatpush1.bf16.msra.mxu0 0
      %268 = vmatprep.subr.bf16.mxu0 0
      %269 = vmatpush1.bf16.msra.mxu0 0
      %270 = vmatprep.subr.bf16.mxu0 0
      %271 = vmatpush1.bf16.msra.mxu0 0
      %272 = vmatprep.subr.bf16.mxu0 0
      %273 = vmatpush1.bf16.msra.mxu0 0
      %274 = vmatprep.subr.bf16.mxu0 0
      %275 = vmatpush1.bf16.msra.mxu0 0
      %276 = vmatprep.mubr.bf16.mxu0 0
      %277 = vmatmul.mubr.bf16.gmra.mrb[0].mxu0 %v242
      %v278 = vpop.f32.mrb[0].mxu0
      %v279 = vadd.f32 %v233, %v278
      %v280 = vpop.f32.mrb[0].mxu0
      %v281 = vpop.f32.mrb[0].mxu0
      %v282 = vpop.f32.mrb[0].mxu0
      %283 = vdwg.mxu0
      %v284 = vmax.f32 %v279, 0.0
      %vm285 = vcmask 261120
      %286 = vst.msk [vmem:[#allocation5] sm:$0xff] %vm285, %v284
    $region41: #{resgat_encoder.3} parent=1 // pred_fallthru
      _
    // Predicated region
    $region42: #{resgat_encoder.3} parent=1 // pred_check
      _
    $region43: #{resgat_encoder.3} parent=1 // pred_check_branch
      %288 = sbr.rel (0) target = $region45
    $region44: #{resgat_encoder.3} parent=1 // pred_region
      %s290 = ssub.s32 128, 128
      %291 = vsyncadd [#allocation6], %s290
      %s293 = sshll.u32 [#allocation5], 4
      %s294 = int_to_ptr.vmem [resolvable:$true] %s293
      %296 = dma.vmem_to_hbm [thread:$0]  %s294, 128, %s8, [#allocation6]
    $region45: #{resgat_encoder.3} parent=1 // pred_fallthru
      _
    // Predicated region
    $region46: #{resgat_encoder.3} parent=1 // pred_check
      _
    $region47: #{resgat_encoder.3} parent=1 // pred_check_branch
      %298 = sbr.rel (0) target = $region49
    $region48: #{resgat_encoder.3} parent=1 // pred_region
      %299 = dma.done [#allocation6], 128
    $region49: #{resgat_encoder.3} parent=1 // pred_fallthru
      _
    %300 = vsyncpa [#allocation6], 1

</llo_original>
